<compile_context>
chip_gen: v7x
topology: tpu7x:2x2x1
jax: 0.10.0
libtpu: 0.0.40
codegen_flags: <defaults>
</compile_context>

<pallas_src>
import jax
import jax.numpy as jnp
from jax.experimental import pallas as pl
from jax.experimental.pallas import tpu as pltpu

# ---------------- configuration (small synthetic shapes) ----------------
STATE_DIM = 6
GOAL_DIM = 3
OBS_DIM = STATE_DIM + 2 * GOAL_DIM      # 12
OBSTACLE_DIM = 4
OBSTACLE_NUM = 8                        # N
HIDDEN_SIZES = (32, 32)
H0 = HIDDEN_SIZES[0]                    # 32
LATENT = HIDDEN_SIZES[-1]               # 32
ACT_DIM = 4
ACT_LIMIT = 1.0
LOG_STD_MIN = -20.0
LOG_STD_MAX = 2.0
BATCH = 2


def _softplus(x):
    # numerically stable softplus
    return jnp.maximum(x, 0.0) + jnp.log1p(jnp.exp(-jnp.abs(x)))


# ---------------------------- the kernel ---------------------------------
def actor_kernel(obs_ref, obst_ref, amask_ref,
                 w_in_ref, w_h_ref, w_qkv_ref, w_head_ref, b_ref,
                 out_ref):
    obs = obs_ref[...]                 # (TB, OBS_DIM)
    obst = obst_ref[...]               # (TB*N, OBSTACLE_DIM)   (flattened batch*tokens)
    amask = amask_ref[...]             # (TB, N+1)  == cat([obstacle_mask, ones], -1)
    TB = obs.shape[0]
    N = amask.shape[1] - 1
    L = LATENT

    # ---- packed parameters (static slices of a few VMEM-resident arrays) ----
    w_in = w_in_ref[...]               # (OBS_DIM + OBSTACLE_DIM, H0)
    w_h = w_h_ref[...]                 # (2*H0, L)
    w_qkv = w_qkv_ref[...]             # (L, 3L)   = [q_w | k_w | v_w]
    w_head = w_head_ref[...]           # (L, 2*ACT_DIM) = [mu_w | ls_w]
    b = b_ref[...]                     # (8, 3L)   bias block

    sg_w1, ob_w1 = w_in[:OBS_DIM, :], w_in[OBS_DIM:, :]
    sg_w2, ob_w2 = w_h[:H0, :], w_h[H0:, :]
    sg_b1, sg_b2 = b[0:1, :H0], b[1:2, :L]
    ob_b1, ob_b2 = b[2:3, :H0], b[3:4, :L]
    qkv_b = b[4:5, :3 * L]
    head_b = b[5:6, :2 * ACT_DIM]

    # ---- embeddings: 2-layer ReLU MLPs as plain 2-D matmuls ----
    h = jnp.maximum(jnp.dot(obs, sg_w1, preferred_element_type=jnp.float32) + sg_b1, 0.0)
    sg = jnp.maximum(jnp.dot(h, sg_w2, preferred_element_type=jnp.float32) + sg_b2, 0.0)      # (TB, L)

    h2 = jnp.maximum(jnp.dot(obst, ob_w1, preferred_element_type=jnp.float32) + ob_b1, 0.0)
    oe = jnp.maximum(jnp.dot(h2, ob_w2, preferred_element_type=jnp.float32) + ob_b2, 0.0)     # (TB*N, L)

    # ---- fused QKV projection; only token 0's query row is consumed ----
    qkv_sg = jnp.dot(sg, w_qkv, preferred_element_type=jnp.float32) + qkv_b                   # (TB, 3L)
    qkv_oe = jnp.dot(oe, w_qkv, preferred_element_type=jnp.float32) + qkv_b                   # (TB*N, 3L)

    q_sg = qkv_sg[:, :L]
    k_sg = qkv_sg[:, L:2 * L]
    v_sg = qkv_sg[:, 2 * L:]
    k_oe = qkv_oe[:, L:2 * L].reshape(TB, N, L)
    v_oe = qkv_oe[:, 2 * L:].reshape(TB, N, L)

    # ---- single attention score row for query token 0 ----
    inv_sqrt_dk = 1.0 / jnp.sqrt(jnp.float32(L))
    score_self = jnp.sum(q_sg * k_sg, axis=-1, keepdims=True) * inv_sqrt_dk                   # (TB, 1)
    score_obs = jnp.sum(q_sg[:, None, :] * k_oe, axis=-1) * inv_sqrt_dk                       # (TB, N)

    # Exactly the PyTorch masking: augmented_mask = [obstacle_mask, 1] applied to the
    # key columns [sg, obs_0 .. obs_{N-1}]  (so the last obstacle column is always on,
    # which also guarantees a non-empty softmax).
    neg = jnp.float32(-1.0e9)
    score_self = jnp.where(amask[:, 0:1] == 0.0, neg, score_self)
    score_obs = jnp.where(amask[:, 1:] == 0.0, neg, score_obs)

    m = jnp.maximum(score_self, jnp.max(score_obs, axis=-1, keepdims=True))                   # (TB, 1)
    e_self = jnp.exp(score_self - m)
    e_obs = jnp.exp(score_obs - m)
    denom = e_self + jnp.sum(e_obs, axis=-1, keepdims=True)
    a_self = e_self / denom                                                                   # (TB, 1)
    a_obs = e_obs / denom                                                                     # (TB, N)

    attn_out = a_self * v_sg + jnp.sum(a_obs[:, :, None] * v_oe, axis=1)                      # (TB, L)

    # ---- GaussianPolicyHead (deterministic=True, with_logprob=True), fused mu/log_std ----
    head = jnp.dot(attn_out, w_head, preferred_element_type=jnp.float32) + head_b             # (TB, 2*ACT_DIM)
    mu = head[:, :ACT_DIM]
    log_std = jnp.clip(head[:, ACT_DIM:], LOG_STD_MIN, LOG_STD_MAX)

    # pi_action == mu, so Normal(mu, std).log_prob(mu) == -log_std - 0.5*log(2*pi);
    # the z/std terms are identically zero and were removed.
    # TODO(synk): stochastic rsample() path would need pltpu.prng_* normals; only the
    # deterministic branch (pi_action = mu) is implemented here.
    logp = jnp.sum(-log_std - 0.5 * jnp.log(2.0 * jnp.pi), axis=-1, keepdims=True)
    logp = logp - jnp.sum(2.0 * (jnp.log(2.0) - mu - _softplus(-2.0 * mu)),
                          axis=-1, keepdims=True)

    pi = ACT_LIMIT * jnp.tanh(mu)
    # single lane-contiguous output: [pi (ACT_DIM) | logp (1)]
    out_ref[...] = jnp.concatenate([pi, logp], axis=-1).astype(out_ref.dtype)


# ---------------------------- parameter packing ----------------------------
def pack_params(params):
    (sg_w1, sg_b1, sg_w2, sg_b2,
     ob_w1, ob_b1, ob_w2, ob_b2,
     q_w, q_b, k_w, k_b, v_w, v_b,
     mu_w, mu_b, ls_w, ls_b) = params

    w_in = jnp.concatenate([sg_w1, ob_w1], axis=0)          # (OBS_DIM + OBSTACLE_DIM, H0)
    w_h = jnp.concatenate([sg_w2, ob_w2], axis=0)           # (2*H0, L)
    w_qkv = jnp.concatenate([q_w, k_w, v_w], axis=1)        # (L, 3L)
    w_head = jnp.concatenate([mu_w, ls_w], axis=1)          # (L, 2*ACT_DIM)

    wb = 3 * LATENT

    def row(v):
        v = v.reshape(-1)
        return jnp.pad(v, (0, wb - v.shape[0]))[None, :]

    b_all = jnp.concatenate([
        row(sg_b1), row(sg_b2), row(ob_b1), row(ob_b2),
        row(jnp.concatenate([q_b.reshape(-1), k_b.reshape(-1), v_b.reshape(-1)])),
        row(jnp.concatenate([mu_b.reshape(-1), ls_b.reshape(-1)])),
        jnp.zeros((2, wb), jnp.float32),
    ], axis=0)                                              # (8, 3L)
    return (w_in, w_h, w_qkv, w_head, b_all)


# ---------------------------- wrapper -------------------------------------
def squashed_attention_actor(obs, obstacles, packed_params, *, block_b=None):
    """obs: (B, OBS_DIM), obstacles: (B, OBSTACLE_DIM + 1, OBSTACLE_NUM)."""
    B = obs.shape[0]
    N = OBSTACLE_NUM

    # layout glue (mirrors obstacles_data.permute(0,2,1) / obstacles[:, -1, :]):
    obst_flat = jnp.transpose(obstacles[:, :OBSTACLE_DIM, :], (0, 2, 1)
                              ).reshape(B * N, OBSTACLE_DIM)                    # (B*N, D)
    mask = obstacles[:, -1, :]                                                  # (B, N)
    amask = jnp.concatenate([mask, jnp.ones((B, 1), mask.dtype)], axis=-1)      # (B, N+1)

    w_in, w_h, w_qkv, w_head, b_all = packed_params
    inputs = (obs, obst_flat, amask, w_in, w_h, w_qkv, w_head, b_all)
    out_shape = jax.ShapeDtypeStruct((B, ACT_DIM + 1), jnp.float32)

    if block_b is None or block_b >= B:
        # single-shot: no grid, no double-buffer pipeline, whole arrays in VMEM.
        out = pl.pallas_call(
            actor_kernel,
            out_shape=out_shape,
            in_specs=[pl.BlockSpec(memory_space=pltpu.MemorySpace.VMEM)] * len(inputs),
            out_specs=pl.BlockSpec(memory_space=pltpu.MemorySpace.VMEM),
        )(*inputs)
    else:
        assert B % block_b == 0 and block_b % 8 == 0
        tb = block_b

        def full2d(shape):
            return pl.BlockSpec(shape, lambda i: (0, 0))

        out = pl.pallas_call(
            actor_kernel,
            out_shape=out_shape,
            grid=(B // tb,),
            in_specs=[
                pl.BlockSpec((tb, OBS_DIM), lambda i: (i, 0)),
                pl.BlockSpec((tb * N, OBSTACLE_DIM), lambda i: (i, 0)),
                pl.BlockSpec((tb, N + 1), lambda i: (i, 0)),
                full2d(w_in.shape), full2d(w_h.shape),
                full2d(w_qkv.shape), full2d(w_head.shape), full2d(b_all.shape),
            ],
            out_specs=pl.BlockSpec((tb, ACT_DIM + 1), lambda i: (i, 0)),
            compiler_params=pltpu.CompilerParams(
                dimension_semantics=("parallel",)),
        )(*inputs)

    return out[:, :ACT_DIM], out[:, ACT_DIM]


# ----------------------- deterministic params -----------------------------
def make_params(key):
    def linear(k, fan_in, fan_out):
        k1, k2 = jax.random.split(k)
        w = jax.random.normal(k1, (fan_in, fan_out), jnp.float32) / jnp.sqrt(fan_in)
        b = 0.01 * jax.random.normal(k2, (1, fan_out), jnp.float32)
        return w, b

    keys = jax.random.split(key, 10)
    sg_w1, sg_b1 = linear(keys[0], OBS_DIM, HIDDEN_SIZES[0])
    sg_w2, sg_b2 = linear(keys[1], HIDDEN_SIZES[0], HIDDEN_SIZES[1])
    ob_w1, ob_b1 = linear(keys[2], OBSTACLE_DIM, HIDDEN_SIZES[0])
    ob_w2, ob_b2 = linear(keys[3], HIDDEN_SIZES[0], HIDDEN_SIZES[1])
    q_w, q_b = linear(keys[4], LATENT, LATENT)
    k_w, k_b = linear(keys[5], LATENT, LATENT)
    v_w, v_b = linear(keys[6], LATENT, LATENT)
    mu_w, mu_b = linear(keys[7], LATENT, ACT_DIM)
    ls_w, ls_b = linear(keys[8], LATENT, ACT_DIM)
    return (sg_w1, sg_b1, sg_w2, sg_b2,
            ob_w1, ob_b1, ob_w2, ob_b2,
            q_w, q_b, k_w, k_b, v_w, v_b,
            mu_w, mu_b, ls_w, ls_b)


# ----------------------- pure-JAX reference (for checking) ----------------
def reference_forward(obs, obstacles, params):
    (sg_w1, sg_b1, sg_w2, sg_b2,
     ob_w1, ob_b1, ob_w2, ob_b2,
     q_w, q_b, k_w, k_b, v_w, v_b,
     mu_w, mu_b, ls_w, ls_b) = params
    B = obs.shape[0]
    sg = jnp.maximum(jnp.maximum(obs @ sg_w1 + sg_b1, 0.0) @ sg_w2 + sg_b2, 0.0)
    od = jnp.transpose(obstacles[:, :OBSTACLE_DIM, :], (0, 2, 1))
    oe = jnp.maximum(jnp.maximum(od @ ob_w1 + ob_b1, 0.0) @ ob_w2 + ob_b2, 0.0)
    comb = jnp.concatenate([sg[:, None, :], oe], axis=1)
    q, k, v = comb @ q_w + q_b, comb @ k_w + k_b, comb @ v_w + v_b
    mask = obstacles[:, -1, :]
    aug = jnp.concatenate([mask, jnp.ones((B, 1), mask.dtype)], axis=-1)
    sc = jnp.einsum('btl,bsl->bts', q, k) / jnp.sqrt(jnp.float32(LATENT))
    sc = jnp.where(aug[:, None, :] == 0.0, -1.0e9, sc)
    attn = jax.nn.softmax(sc, axis=-1)
    x = jnp.einsum('bts,bsl->btl', attn, v)[:, 0, :]
    mu = x @ mu_w + mu_b
    log_std = jnp.clip(x @ ls_w + ls_b, LOG_STD_MIN, LOG_STD_MAX)
    pi_action = mu
    logp = jnp.sum(-log_std - 0.5 * jnp.log(2.0 * jnp.pi), axis=-1)
    logp = logp - jnp.sum(
        2.0 * (jnp.log(2.0) - pi_action - jax.nn.softplus(-2.0 * pi_action)), axis=-1)
    return ACT_LIMIT * jnp.tanh(pi_action), logp


# ------------------------------- main --------------------------------------
if __name__ == "__main__":
    key = jax.random.PRNGKey(0)
    k_obs, k_obst, k_mask, k_param = jax.random.split(key, 4)

    params = make_params(k_param)
    packed = pack_params(params)

    def make_inputs(k_o, k_f, k_m, batch):
        o = jax.random.normal(k_o, (batch, OBS_DIM), jnp.float32)
        feat = jax.random.normal(k_f, (batch, OBSTACLE_DIM, OBSTACLE_NUM), jnp.float32)
        msk = jax.random.bernoulli(k_m, 0.7, (batch, 1, OBSTACLE_NUM)).astype(jnp.float32)
        return o, jnp.concatenate([feat, msk], axis=1)      # (B, D+1, N)

    # ---- small single-shot case (B=2): gridless, whole-array-in-VMEM ----
    obs, obstacles = make_inputs(k_obs, k_obst, k_mask, BATCH)
    pi, logp = squashed_attention_actor(obs, obstacles, packed)
    jax.block_until_ready((pi, logp))
    pi_ref, logp_ref = reference_forward(obs, obstacles, params)
    assert pi.shape == (BATCH, ACT_DIM) and logp.shape == (BATCH,)
    assert jnp.allclose(pi, pi_ref, atol=1e-3, rtol=1e-3)
    assert jnp.allclose(logp, logp_ref, atol=1e-3, rtol=1e-3)

    # ---- batched case (B=64): batch-tiled grid marked "parallel" ----
    kb = jax.random.split(jax.random.PRNGKey(1), 3)
    obs_b, obstacles_b = make_inputs(kb[0], kb[1], kb[2], 64)
    pi_b, logp_b = squashed_attention_actor(obs_b, obstacles_b, packed, block_b=8)
    jax.block_until_ready((pi_b, logp_b))
    pi_rb, logp_rb = reference_forward(obs_b, obstacles_b, params)
    assert jnp.allclose(pi_b, pi_rb, atol=1e-3, rtol=1e-3)
    assert jnp.allclose(logp_b, logp_rb, atol=1e-3, rtol=1e-3)

    print("KERNEL_OK")
</pallas_src>

<mosaic_0001>
module attributes {stable_mosaic.version = 11 : i64} {
  func.func @actor_kernel(%arg0: memref<2x12xf32, #tpu.memory_space<vmem>>, %arg1: memref<16x4xf32, #tpu.memory_space<vmem>>, %arg2: memref<2x9xf32, #tpu.memory_space<vmem>>, %arg3: memref<16x32xf32, #tpu.memory_space<vmem>>, %arg4: memref<64x32xf32, #tpu.memory_space<vmem>>, %arg5: memref<32x96xf32, #tpu.memory_space<vmem>>, %arg6: memref<32x8xf32, #tpu.memory_space<vmem>>, %arg7: memref<8x96xf32, #tpu.memory_space<vmem>>, %arg8: memref<2x5xf32, #tpu.memory_space<vmem>>) attributes {dimension_semantics = [], scalar_prefetch = 0 : i64, scratch_operands = 0 : i64, tpu.core_type = #tpu.core_type<tc>} {
    %c0 = arith.constant 0 : index
    %c0_0 = arith.constant 0 : index
    %0 = vector.load %arg0[%c0, %c0_0] : memref<2x12xf32, #tpu.memory_space<vmem>>, vector<2x12xf32>
    %c0_1 = arith.constant 0 : index
    %c0_2 = arith.constant 0 : index
    %1 = vector.load %arg1[%c0_1, %c0_2] : memref<16x4xf32, #tpu.memory_space<vmem>>, vector<16x4xf32>
    %c0_3 = arith.constant 0 : index
    %c0_4 = arith.constant 0 : index
    %2 = vector.load %arg2[%c0_3, %c0_4] : memref<2x9xf32, #tpu.memory_space<vmem>>, vector<2x9xf32>
    %c0_5 = arith.constant 0 : index
    %c0_6 = arith.constant 0 : index
    %3 = vector.load %arg3[%c0_5, %c0_6] : memref<16x32xf32, #tpu.memory_space<vmem>>, vector<16x32xf32>
    %c0_7 = arith.constant 0 : index
    %c0_8 = arith.constant 0 : index
    %4 = vector.load %arg4[%c0_7, %c0_8] : memref<64x32xf32, #tpu.memory_space<vmem>>, vector<64x32xf32>
    %c0_9 = arith.constant 0 : index
    %c0_10 = arith.constant 0 : index
    %5 = vector.load %arg5[%c0_9, %c0_10] : memref<32x96xf32, #tpu.memory_space<vmem>>, vector<32x96xf32>
    %c0_11 = arith.constant 0 : index
    %c0_12 = arith.constant 0 : index
    %6 = vector.load %arg6[%c0_11, %c0_12] : memref<32x8xf32, #tpu.memory_space<vmem>>, vector<32x8xf32>
    %c0_13 = arith.constant 0 : index
    %c0_14 = arith.constant 0 : index
    %7 = vector.load %arg7[%c0_13, %c0_14] : memref<8x96xf32, #tpu.memory_space<vmem>>, vector<8x96xf32>
    %8 = vector.extract_strided_slice %3 {offsets = [0, 0], sizes = [12, 32], strides = [1, 1]} : vector<16x32xf32> to vector<12x32xf32>
    %9 = vector.extract_strided_slice %3 {offsets = [12, 0], sizes = [4, 32], strides = [1, 1]} : vector<16x32xf32> to vector<4x32xf32>
    %10 = vector.extract_strided_slice %4 {offsets = [0, 0], sizes = [32, 32], strides = [1, 1]} : vector<64x32xf32> to vector<32x32xf32>
    %11 = vector.extract_strided_slice %4 {offsets = [32, 0], sizes = [32, 32], strides = [1, 1]} : vector<64x32xf32> to vector<32x32xf32>
    %12 = vector.extract_strided_slice %7 {offsets = [0, 0], sizes = [1, 32], strides = [1, 1]} : vector<8x96xf32> to vector<1x32xf32>
    %13 = vector.extract_strided_slice %7 {offsets = [1, 0], sizes = [1, 32], strides = [1, 1]} : vector<8x96xf32> to vector<1x32xf32>
    %14 = vector.extract_strided_slice %7 {offsets = [2, 0], sizes = [1, 32], strides = [1, 1]} : vector<8x96xf32> to vector<1x32xf32>
    %15 = vector.extract_strided_slice %7 {offsets = [3, 0], sizes = [1, 32], strides = [1, 1]} : vector<8x96xf32> to vector<1x32xf32>
    %16 = vector.extract_strided_slice %7 {offsets = [4, 0], sizes = [1, 96], strides = [1, 1]} : vector<8x96xf32> to vector<1x96xf32>
    %17 = vector.extract_strided_slice %7 {offsets = [5, 0], sizes = [1, 8], strides = [1, 1]} : vector<8x96xf32> to vector<1x8xf32>
    %cst = arith.constant dense<0.000000e+00> : vector<2x32xf32>
    %18 = tpu.matmul %0, %8, %cst {dimension_numbers = #tpu.dot_dimension_numbers<[1], [0], [0], [1], [0, 0, 1, 1], [], []>} : vector<2x12xf32>, vector<12x32xf32>, vector<2x32xf32> -> vector<2x32xf32>
    %19 = vector.broadcast %12 : vector<1x32xf32> to vector<2x32xf32>
    %20 = arith.addf %18, %19 : vector<2x32xf32>
    %cst_15 = arith.constant 0.000000e+00 : f32
    %21 = vector.broadcast %cst_15 : f32 to vector<2x32xf32>
    %22 = arith.maximumf %20, %21 : vector<2x32xf32>
    %cst_16 = arith.constant dense<0.000000e+00> : vector<2x32xf32>
    %23 = tpu.matmul %22, %10, %cst_16 {dimension_numbers = #tpu.dot_dimension_numbers<[1], [0], [0], [1], [0, 0, 1, 1], [], []>} : vector<2x32xf32>, vector<32x32xf32>, vector<2x32xf32> -> vector<2x32xf32>
    %24 = vector.broadcast %13 : vector<1x32xf32> to vector<2x32xf32>
    %25 = arith.addf %23, %24 : vector<2x32xf32>
    %cst_17 = arith.constant 0.000000e+00 : f32
    %26 = vector.broadcast %cst_17 : f32 to vector<2x32xf32>
    %27 = arith.maximumf %25, %26 : vector<2x32xf32>
    %cst_18 = arith.constant dense<0.000000e+00> : vector<16x32xf32>
    %28 = tpu.matmul %1, %9, %cst_18 {dimension_numbers = #tpu.dot_dimension_numbers<[1], [0], [0], [1], [0, 0, 1, 1], [], []>} : vector<16x4xf32>, vector<4x32xf32>, vector<16x32xf32> -> vector<16x32xf32>
    %29 = vector.broadcast %14 : vector<1x32xf32> to vector<16x32xf32>
    %30 = arith.addf %28, %29 : vector<16x32xf32>
    %cst_19 = arith.constant 0.000000e+00 : f32
    %31 = vector.broadcast %cst_19 : f32 to vector<16x32xf32>
    %32 = arith.maximumf %30, %31 : vector<16x32xf32>
    %cst_20 = arith.constant dense<0.000000e+00> : vector<16x32xf32>
    %33 = tpu.matmul %32, %11, %cst_20 {dimension_numbers = #tpu.dot_dimension_numbers<[1], [0], [0], [1], [0, 0, 1, 1], [], []>} : vector<16x32xf32>, vector<32x32xf32>, vector<16x32xf32> -> vector<16x32xf32>
    %34 = vector.broadcast %15 : vector<1x32xf32> to vector<16x32xf32>
    %35 = arith.addf %33, %34 : vector<16x32xf32>
    %cst_21 = arith.constant 0.000000e+00 : f32
    %36 = vector.broadcast %cst_21 : f32 to vector<16x32xf32>
    %37 = arith.maximumf %35, %36 : vector<16x32xf32>
    %cst_22 = arith.constant dense<0.000000e+00> : vector<2x96xf32>
    %38 = tpu.matmul %27, %5, %cst_22 {dimension_numbers = #tpu.dot_dimension_numbers<[1], [0], [0], [1], [0, 0, 1, 1], [], []>} : vector<2x32xf32>, vector<32x96xf32>, vector<2x96xf32> -> vector<2x96xf32>
    %39 = vector.broadcast %16 : vector<1x96xf32> to vector<2x96xf32>
    %40 = arith.addf %38, %39 : vector<2x96xf32>
    %cst_23 = arith.constant dense<0.000000e+00> : vector<16x96xf32>
    %41 = tpu.matmul %37, %5, %cst_23 {dimension_numbers = #tpu.dot_dimension_numbers<[1], [0], [0], [1], [0, 0, 1, 1], [], []>} : vector<16x32xf32>, vector<32x96xf32>, vector<16x96xf32> -> vector<16x96xf32>
    %42 = vector.broadcast %16 : vector<1x96xf32> to vector<16x96xf32>
    %43 = arith.addf %41, %42 : vector<16x96xf32>
    %44 = vector.extract_strided_slice %40 {offsets = [0, 0], sizes = [2, 32], strides = [1, 1]} : vector<2x96xf32> to vector<2x32xf32>
    %45 = vector.extract_strided_slice %40 {offsets = [0, 32], sizes = [2, 32], strides = [1, 1]} : vector<2x96xf32> to vector<2x32xf32>
    %46 = vector.extract_strided_slice %40 {offsets = [0, 64], sizes = [2, 32], strides = [1, 1]} : vector<2x96xf32> to vector<2x32xf32>
    %47 = vector.extract_strided_slice %43 {offsets = [0, 32], sizes = [16, 32], strides = [1, 1]} : vector<16x96xf32> to vector<16x32xf32>
    %48 = vector.shape_cast %47 : vector<16x32xf32> to vector<2x8x32xf32>
    %49 = vector.extract_strided_slice %43 {offsets = [0, 64], sizes = [16, 32], strides = [1, 1]} : vector<16x96xf32> to vector<16x32xf32>
    %50 = vector.shape_cast %49 : vector<16x32xf32> to vector<2x8x32xf32>
    %cst_24 = arith.constant 3.200000e+01 : f32
    %51 = math.sqrt %cst_24 : f32
    %cst_25 = arith.constant 1.000000e+00 : f32
    %52 = arith.divf %cst_25, %51 : f32
    %53 = arith.mulf %44, %45 : vector<2x32xf32>
    %cst_26 = arith.constant dense<0.000000e+00> : vector<2xf32>
    %54 = vector.multi_reduction <add>, %53, %cst_26 [1] : vector<2x32xf32> to vector<2xf32>
    %55 = vector.shape_cast %54 : vector<2xf32> to vector<2x1xf32>
    %56 = vector.broadcast %52 : f32 to vector<2x1xf32>
    %57 = arith.mulf %55, %56 : vector<2x1xf32>
    %58 = vector.shape_cast %44 : vector<2x32xf32> to vector<2x1x32xf32>
    %59 = vector.broadcast %58 : vector<2x1x32xf32> to vector<2x8x32xf32>
    %60 = arith.mulf %59, %48 : vector<2x8x32xf32>
    %cst_27 = arith.constant dense<0.000000e+00> : vector<2x8xf32>
    %61 = vector.multi_reduction <add>, %60, %cst_27 [2] : vector<2x8x32xf32> to vector<2x8xf32>
    %62 = vector.broadcast %52 : f32 to vector<2x8xf32>
    %63 = arith.mulf %61, %62 : vector<2x8xf32>
    %64 = vector.extract_strided_slice %2 {offsets = [0, 0], sizes = [2, 1], strides = [1, 1]} : vector<2x9xf32> to vector<2x1xf32>
    %cst_28 = arith.constant 0.000000e+00 : f32
    %65 = vector.broadcast %cst_28 : f32 to vector<2x1xf32>
    %66 = arith.cmpf oeq, %64, %65 : vector<2x1xf32>
    %cst_29 = arith.constant -1.000000e+09 : f32
    %67 = vector.broadcast %cst_29 : f32 to vector<2x1xf32>
    %68 = arith.select %66, %67, %57 : vector<2x1xi1>, vector<2x1xf32>
    %69 = vector.extract_strided_slice %2 {offsets = [0, 1], sizes = [2, 8], strides = [1, 1]} : vector<2x9xf32> to vector<2x8xf32>
    %cst_30 = arith.constant 0.000000e+00 : f32
    %70 = vector.broadcast %cst_30 : f32 to vector<2x8xf32>
    %71 = arith.cmpf oeq, %69, %70 : vector<2x8xf32>
    %cst_31 = arith.constant -1.000000e+09 : f32
    %72 = vector.broadcast %cst_31 : f32 to vector<2x8xf32>
    %73 = arith.select %71, %72, %63 : vector<2x8xi1>, vector<2x8xf32>
    %cst_32 = arith.constant dense<0xFF800000> : vector<2xf32>
    %74 = vector.multi_reduction <maximumf>, %73, %cst_32 [1] : vector<2x8xf32> to vector<2xf32>
    %75 = vector.shape_cast %74 : vector<2xf32> to vector<2x1xf32>
    %76 = arith.maximumf %68, %75 : vector<2x1xf32>
    %77 = arith.subf %68, %76 : vector<2x1xf32>
    %78 = math.exp %77 : vector<2x1xf32>
    %79 = vector.broadcast %76 : vector<2x1xf32> to vector<2x8xf32>
    %80 = arith.subf %73, %79 : vector<2x8xf32>
    %81 = math.exp %80 : vector<2x8xf32>
    %cst_33 = arith.constant dense<0.000000e+00> : vector<2xf32>
    %82 = vector.multi_reduction <add>, %81, %cst_33 [1] : vector<2x8xf32> to vector<2xf32>
    %83 = vector.shape_cast %82 : vector<2xf32> to vector<2x1xf32>
    %84 = arith.addf %78, %83 : vector<2x1xf32>
    %85 = arith.divf %78, %84 : vector<2x1xf32>
    %86 = vector.broadcast %84 : vector<2x1xf32> to vector<2x8xf32>
    %87 = arith.divf %81, %86 : vector<2x8xf32>
    %88 = vector.broadcast %85 : vector<2x1xf32> to vector<2x32xf32>
    %89 = arith.mulf %88, %46 : vector<2x32xf32>
    %90 = vector.shape_cast %87 : vector<2x8xf32> to vector<2x8x1xf32>
    %91 = vector.broadcast %90 : vector<2x8x1xf32> to vector<2x8x32xf32>
    %92 = arith.mulf %91, %50 : vector<2x8x32xf32>
    %cst_34 = arith.constant dense<0.000000e+00> : vector<2x32xf32>
    %93 = vector.multi_reduction <add>, %92, %cst_34 [1] : vector<2x8x32xf32> to vector<2x32xf32>
    %94 = arith.addf %89, %93 : vector<2x32xf32>
    %cst_35 = arith.constant dense<0.000000e+00> : vector<2x8xf32>
    %95 = tpu.matmul %94, %6, %cst_35 {dimension_numbers = #tpu.dot_dimension_numbers<[1], [0], [0], [1], [0, 0, 1, 1], [], []>} : vector<2x32xf32>, vector<32x8xf32>, vector<2x8xf32> -> vector<2x8xf32>
    %96 = vector.broadcast %17 : vector<1x8xf32> to vector<2x8xf32>
    %97 = arith.addf %95, %96 : vector<2x8xf32>
    %98 = vector.extract_strided_slice %97 {offsets = [0, 0], sizes = [2, 4], strides = [1, 1]} : vector<2x8xf32> to vector<2x4xf32>
    %99 = vector.extract_strided_slice %97 {offsets = [0, 4], sizes = [2, 4], strides = [1, 1]} : vector<2x8xf32> to vector<2x4xf32>
    %cst_36 = arith.constant -2.000000e+01 : f32
    %cst_37 = arith.constant 2.000000e+00 : f32
    %100 = vector.broadcast %cst_36 : f32 to vector<2x4xf32>
    %101 = arith.maximumf %100, %99 : vector<2x4xf32>
    %102 = vector.broadcast %cst_37 : f32 to vector<2x4xf32>
    %103 = arith.minimumf %102, %101 : vector<2x4xf32>
    %cst_38 = arith.constant 0.000000e+00 : f32
    %104 = vector.broadcast %cst_38 : f32 to vector<2x4xf32>
    %105 = arith.subf %104, %103 : vector<2x4xf32>
    %cst_39 = arith.constant 6.28318548 : f32
    %106 = math.log %cst_39 : f32
    %cst_40 = arith.constant 5.000000e-01 : f32
    %107 = arith.mulf %cst_40, %106 : f32
    %108 = vector.broadcast %107 : f32 to vector<2x4xf32>
    %109 = arith.subf %105, %108 : vector<2x4xf32>
    %cst_41 = arith.constant dense<0.000000e+00> : vector<2xf32>
    %110 = vector.multi_reduction <add>, %109, %cst_41 [1] : vector<2x4xf32> to vector<2xf32>
    %111 = vector.shape_cast %110 : vector<2xf32> to vector<2x1xf32>
    %cst_42 = arith.constant 2.000000e+00 : f32
    %112 = math.log %cst_42 : f32
    %113 = vector.broadcast %112 : f32 to vector<2x4xf32>
    %114 = arith.subf %113, %98 : vector<2x4xf32>
    %cst_43 = arith.constant -2.000000e+00 : f32
    %115 = vector.broadcast %cst_43 : f32 to vector<2x4xf32>
    %116 = arith.mulf %115, %98 : vector<2x4xf32>
    %cst_44 = arith.constant 0.000000e+00 : f32
    %117 = vector.broadcast %cst_44 : f32 to vector<2x4xf32>
    %118 = arith.maximumf %116, %117 : vector<2x4xf32>
    %119 = math.absf %116 : vector<2x4xf32>
    %cst_45 = arith.constant 0.000000e+00 : f32
    %120 = vector.broadcast %cst_45 : f32 to vector<2x4xf32>
    %121 = arith.subf %120, %119 : vector<2x4xf32>
    %122 = math.exp %121 : vector<2x4xf32>
    %123 = math.log1p %122 : vector<2x4xf32>
    %124 = arith.addf %118, %123 : vector<2x4xf32>
    %125 = arith.subf %114, %124 : vector<2x4xf32>
    %cst_46 = arith.constant 2.000000e+00 : f32
    %126 = vector.broadcast %cst_46 : f32 to vector<2x4xf32>
    %127 = arith.mulf %126, %125 : vector<2x4xf32>
    %cst_47 = arith.constant dense<0.000000e+00> : vector<2xf32>
    %128 = vector.multi_reduction <add>, %127, %cst_47 [1] : vector<2x4xf32> to vector<2xf32>
    %129 = vector.shape_cast %128 : vector<2xf32> to vector<2x1xf32>
    %130 = arith.subf %111, %129 : vector<2x1xf32>
    %131 = math.tanh %98 : vector<2x4xf32>
    %cst_48 = arith.constant 1.000000e+00 : f32
    %132 = vector.broadcast %cst_48 : f32 to vector<2x4xf32>
    %133 = arith.mulf %132, %131 : vector<2x4xf32>
    %134 = tpu.concatenate %133, %130 in 1 : vector<2x4xf32>, vector<2x1xf32> -> vector<2x5xf32>
    %c0_49 = arith.constant 0 : index
    %c0_50 = arith.constant 0 : index
    %135 = vector.load %arg8[%c0_49, %c0_50] : memref<2x5xf32, #tpu.memory_space<vmem>>, vector<2x5xf32>
    tpu.vector_store %arg8[%c0_49, %c0_50], %134 {strides = array<i32>} : memref<2x5xf32, #tpu.memory_space<vmem>>, vector<2x5xf32>,
    return
  }
}

</mosaic_0001>

<llo_original>
// kernel: tpu_custom_call.1
$region0: #{tpu_custom_call.1}
  #allocation0 [shape = 'u32[]', space=smem, size = 0x4, offset = 0x4, fixed_abs, tag = 'smem constant byte address 0x4 - core index']
  #allocation1 [shape = 'u32[144,128]{1,0:T(1,128)}', space=vmem, size = 0x12000, scoped, tag = 'internal scratch']
  %s0 = inlined_call_operand.vmem [shape: f32[2,12], index: 0, kind: input, shape index: {}]
  %s1 = inlined_call_operand.vmem [shape: f32[16,4], index: 1, kind: input, shape index: {}]
  %s2 = inlined_call_operand.vmem [shape: f32[2,9], index: 2, kind: input, shape index: {}]
  %s3 = inlined_call_operand.vmem [shape: f32[16,32], index: 3, kind: input, shape index: {}]
  %s4 = inlined_call_operand.vmem [shape: f32[64,32], index: 4, kind: input, shape index: {}]
  %s5 = inlined_call_operand.vmem [shape: f32[32,96], index: 5, kind: input, shape index: {}]
  %s6 = inlined_call_operand.vmem [shape: f32[32,8], index: 6, kind: input, shape index: {}]
  %s7 = inlined_call_operand.vmem [shape: f32[8,96], index: 7, kind: input, shape index: {}]
  %s8 = inlined_call_operand.hbm [shape: f32[2,5], index: 8, kind: output, shape index: {}]
  %s9 = sld [smem:[#allocation0]]
  $region42: #{tpu_custom_call.1} parent=0
    _
  %s11 = ssub.s32 1, %s9
  %s12 = scalar_select 0, %s11, %s9
  $region1: #{tpu_custom_call.1} parent=0
    #allocation2 [shape = 'u8[1024]{0}', space=vmem, size = 0x400, scoped, tag = 'output window, operand 0, single buffered']
    #allocation3 [shape = 's32[1]{0}', space=sflag, size = 0x4, scoped, tag = 'scoped memory for tpu_custom_call.1']
    %13 = vsyncpa [#allocation3], 0
    // Predicated region
    $region2: #{tpu_custom_call.1} parent=1 // pred_check
      _
    $region3: #{tpu_custom_call.1} parent=1 // pred_check_branch
      %15 = sbr.rel (0) target = $region5
    $region4: #{tpu_custom_call.1} parent=1 // pred_region
      _
    $region5: #{tpu_custom_call.1} parent=1 // pred_fallthru
      _
    // Predicated region
    $region6: #{tpu_custom_call.1} parent=1 // pred_check
      _
    $region7: #{tpu_custom_call.1} parent=1 // pred_check_branch
      %17 = sbr.rel (0) target = $region9
    $region8: #{tpu_custom_call.1} parent=1 // pred_region
      _
    $region9: #{tpu_custom_call.1} parent=1 // pred_fallthru
      _
    // Predicated region
    $region10: #{tpu_custom_call.1} parent=1 // pred_check
      _
    $region11: #{tpu_custom_call.1} parent=1 // pred_check_branch
      %19 = sbr.rel (0) target = $region13
    $region12: #{tpu_custom_call.1} parent=1 // pred_region
      _
    $region13: #{tpu_custom_call.1} parent=1 // pred_fallthru
      _
    // Predicated region
    $region14: #{tpu_custom_call.1} parent=1 // pred_check
      _
    $region15: #{tpu_custom_call.1} parent=1 // pred_check_branch
      %21 = sbr.rel (0) target = $region17
    $region16: #{tpu_custom_call.1} parent=1 // pred_region
      _
    $region17: #{tpu_custom_call.1} parent=1 // pred_fallthru
      _
    // Predicated region
    $region18: #{tpu_custom_call.1} parent=1 // pred_check
      _
    $region19: #{tpu_custom_call.1} parent=1 // pred_check_branch
      %23 = sbr.rel (0) target = $region21
    $region20: #{tpu_custom_call.1} parent=1 // pred_region
      _
    $region21: #{tpu_custom_call.1} parent=1 // pred_fallthru
      _
    // Predicated region
    $region22: #{tpu_custom_call.1} parent=1 // pred_check
      _
    $region23: #{tpu_custom_call.1} parent=1 // pred_check_branch
      %25 = sbr.rel (0) target = $region25
    $region24: #{tpu_custom_call.1} parent=1 // pred_region
      _
    $region25: #{tpu_custom_call.1} parent=1 // pred_fallthru
      _
    // Predicated region
    $region26: #{tpu_custom_call.1} parent=1 // pred_check
      _
    $region27: #{tpu_custom_call.1} parent=1 // pred_check_branch
      %27 = sbr.rel (0) target = $region29
    $region28: #{tpu_custom_call.1} parent=1 // pred_region
      _
    $region29: #{tpu_custom_call.1} parent=1 // pred_fallthru
      _
    // Predicated region
    $region30: #{tpu_custom_call.1} parent=1 // pred_check
      _
    $region31: #{tpu_custom_call.1} parent=1 // pred_check_branch
      %29 = sbr.rel (0) target = $region33
    $region32: #{tpu_custom_call.1} parent=1 // pred_region
      _
    $region33: #{tpu_custom_call.1} parent=1 // pred_fallthru
      _
    %v30 = vld [vmem:[%s0] sm:$0x3]
    %v31 = vld [vmem:[%s1] sm:$0xff]
    %v32 = vld [vmem:[%s1 + $0x8] sm:$0xff]
    %v33 = vld [vmem:[%s2] sm:$0x3]
    %v34 = vld [vmem:[%s3] sm:$0xff]
    %v35 = vld [vmem:[%s3 + $0x8] sm:$0xff]
    %v36 = vld [vmem:[%s4] sm:$0xff]
    %v37 = vld [vmem:[%s4 + $0x8] sm:$0xff]
    %v38 = vld [vmem:[%s4 + $0x10] sm:$0xff]
    %v39 = vld [vmem:[%s4 + $0x18] sm:$0xff]
    %v40 = vld [vmem:[%s4 + $0x20] sm:$0xff]
    %v41 = vld [vmem:[%s4 + $0x28] sm:$0xff]
    %v42 = vld [vmem:[%s4 + $0x30] sm:$0xff]
    %v43 = vld [vmem:[%s4 + $0x38] sm:$0xff]
    %v44 = vld [vmem:[%s5] sm:$0xff]
    %v45 = vld [vmem:[%s5 + $0x8] sm:$0xff]
    %v46 = vld [vmem:[%s5 + $0x10] sm:$0xff]
    %v47 = vld [vmem:[%s5 + $0x18] sm:$0xff]
    %v48 = vld [vmem:[%s6] sm:$0xff]
    %v49 = vld [vmem:[%s6 + $0x8] sm:$0xff]
    %v50 = vld [vmem:[%s6 + $0x10] sm:$0xff]
    %v51 = vld [vmem:[%s6 + $0x18] sm:$0xff]
    %v52 = vld [vmem:[%s7] sm:$0xff]
    %v53 = vlaneseq
    %v54 = vshrl.u32 %v53, 7
    %v55 = vsub.s32 0, %v54
    %v56 = vrot.slane %v52, %v55
    %vm57 = vcmask 97280
    %v59 = vsel %vm57, %v30, 0
    %vm61 = vcmask 1043456
    %v63 = vsel %vm61, %v35, 0
    %65 = vmatprep.subr.mxu0 0.0
    %66 = vmatpush1.msra.mxu0 %v34
    %67 = vmatprep.subr.mxu0 0.0
    %68 = vmatpush1.msra.mxu0 %v63
    %69 = vmatprep.subr.mxu0 0.0
    %70 = vmatpush1.msra.mxu0 0.0
    %71 = vmatprep.subr.mxu0 0.0
    %72 = vmatpush1.msra.mxu0 0.0
    %73 = vmatprep.subr.mxu0 0.0
    %74 = vmatpush1.msra.mxu0 0.0
    %75 = vmatprep.subr.mxu0 0.0
    %76 = vmatpush1.msra.mxu0 0.0
    %77 = vmatprep.subr.mxu0 0.0
    %78 = vmatpush1.msra.mxu0 0.0
    %79 = vmatprep.subr.mxu0 0.0
    %80 = vmatpush1.msra.mxu0 0.0
    %81 = vmatprep.subr.mxu0 0.0
    %82 = vmatpush1.msra.mxu0 0.0
    %83 = vmatprep.subr.mxu0 0.0
    %84 = vmatpush1.msra.mxu0 0.0
    %85 = vmatprep.subr.mxu0 0.0
    %86 = vmatpush1.msra.mxu0 0.0
    %87 = vmatprep.subr.mxu0 0.0
    %88 = vmatpush1.msra.mxu0 0.0
    %89 = vmatprep.subr.mxu0 0.0
    %90 = vmatpush1.msra.mxu0 0.0
    %91 = vmatprep.subr.mxu0 0.0
    %92 = vmatpush1.msra.mxu0 0.0
    %93 = vmatprep.subr.mxu0 0.0
    %94 = vmatpush1.msra.mxu0 0.0
    %95 = vmatprep.subr.mxu0 0.0
    %96 = vmatpush1.msra.mxu0 0.0
    %97 = vmatprep.subr.mxu0 0.0
    %98 = vmatpush1.msra.mxu0 0.0
    %99 = vmatprep.subr.mxu0 0.0
    %100 = vmatpush1.msra.mxu0 0.0
    %101 = vmatprep.subr.mxu0 0.0
    %102 = vmatpush1.msra.mxu0 0.0
    %103 = vmatprep.subr.mxu0 0.0
    %104 = vmatpush1.msra.mxu0 0.0
    %105 = vmatprep.subr.mxu0 0.0
    %106 = vmatpush1.msra.mxu0 0.0
    %107 = vmatprep.subr.mxu0 0.0
    %108 = vmatpush1.msra.mxu0 0.0
    %109 = vmatprep.subr.mxu0 0.0
    %110 = vmatpush1.msra.mxu0 0.0
    %111 = vmatprep.subr.mxu0 0.0
    %112 = vmatpush1.msra.mxu0 0.0
    %113 = vmatprep.subr.mxu0 0.0
    %114 = vmatpush1.msra.mxu0 0.0
    %115 = vmatprep.subr.mxu0 0.0
    %116 = vmatpush1.msra.mxu0 0.0
    %117 = vmatprep.subr.mxu0 0.0
    %118 = vmatpush1.msra.mxu0 0.0
    %119 = vmatprep.subr.mxu0 0.0
    %120 = vmatpush1.msra.mxu0 0.0
    %121 = vmatprep.subr.mxu0 0.0
    %122 = vmatpush1.msra.mxu0 0.0
    %123 = vmatprep.subr.mxu0 0.0
    %124 = vmatpush1.msra.mxu0 0.0
    %125 = vmatprep.subr.mxu0 0.0
    %126 = vmatpush1.msra.mxu0 0.0
    %127 = vmatprep.subr.mxu0 0.0
    %128 = vmatpush1.msra.mxu0 0.0
    %129 = vmatprep.mubr.f32.mxu0 0.0
    %130 = vmatmul.mubr.f32.gmra.mrb[0].mxu0 %v59
    %v131 = vpop.f32.mrb[0].mxu0
    %v132 = vadd.f32 %v56, %v131
    %v133 = vpop.f32.mrb[0].mxu0
    %134 = vdwg.mxu0
    %v135 = vmax.f32 %v132, 0.0
    %v136 = vlaneseq
    %v137 = vshrl.u32 %v136, 7
    %v138 = vsub.s32 1, %v137
    %v139 = vrot.slane %v52, %v138
    %vm140 = vcmask 261120
    %v142 = vsel %vm140, %v135, 0
    %144 = vmatprep.subr.mxu0 0.0
    %145 = vmatpush1.msra.mxu0 %v36
    %146 = vmatprep.subr.mxu0 0.0
    %147 = vmatpush1.msra.mxu0 %v37
    %148 = vmatprep.subr.mxu0 0.0
    %149 = vmatpush1.msra.mxu0 %v38
    %150 = vmatprep.subr.mxu0 0.0
    %151 = vmatpush1.msra.mxu0 %v39
    %152 = vmatprep.subr.mxu0 0.0
    %153 = vmatpush1.msra.mxu0 0.0
    %154 = vmatprep.subr.mxu0 0.0
    %155 = vmatpush1.msra.mxu0 0.0
    %156 = vmatprep.subr.mxu0 0.0
    %157 = vmatpush1.msra.mxu0 0.0
    %158 = vmatprep.subr.mxu0 0.0
    %159 = vmatpush1.msra.mxu0 0.0
    %160 = vmatprep.subr.mxu0 0.0
    %161 = vmatpush1.msra.mxu0 0.0
    %162 = vmatprep.subr.mxu0 0.0
    %163 = vmatpush1.msra.mxu0 0.0
    %164 = vmatprep.subr.mxu0 0.0
    %165 = vmatpush1.msra.mxu0 0.0
    %166 = vmatprep.subr.mxu0 0.0
    %167 = vmatpush1.msra.mxu0 0.0
    %168 = vmatprep.subr.mxu0 0.0
    %169 = vmatpush1.msra.mxu0 0.0
    %170 = vmatprep.subr.mxu0 0.0
    %171 = vmatpush1.msra.mxu0 0.0
    %172 = vmatprep.subr.mxu0 0.0
    %173 = vmatpush1.msra.mxu0 0.0
    %174 = vmatprep.subr.mxu0 0.0
    %175 = vmatpush1.msra.mxu0 0.0
    %176 = vmatprep.subr.mxu0 0.0
    %177 = vmatpush1.msra.mxu0 0.0
    %178 = vmatprep.subr.mxu0 0.0
    %179 = vmatpush1.msra.mxu0 0.0
    %180 = vmatprep.subr.mxu0 0.0
    %181 = vmatpush1.msra.mxu0 0.0
    %182 = vmatprep.subr.mxu0 0.0
    %183 = vmatpush1.msra.mxu0 0.0
    %184 = vmatprep.subr.mxu0 0.0
    %185 = vmatpush1.msra.mxu0 0.0
    %186 = vmatprep.subr.mxu0 0.0
    %187 = vmatpush1.msra.mxu0 0.0
    %188 = vmatprep.subr.mxu0 0.0
    %189 = vmatpush1.msra.mxu0 0.0
    %190 = vmatprep.subr.mxu0 0.0
    %191 = vmatpush1.msra.mxu0 0.0
    %192 = vmatprep.subr.mxu0 0.0
    %193 = vmatpush1.msra.mxu0 0.0
    %194 = vmatprep.subr.mxu0 0.0
    %195 = vmatpush1.msra.mxu0 0.0
    %196 = vmatprep.subr.mxu0 0.0
    %197 = vmatpush1.msra.mxu0 0.0
    %198 = vmatprep.subr.mxu0 0.0
    %199 = vmatpush1.msra.mxu0 0.0
    %200 = vmatprep.subr.mxu0 0.0
    %201 = vmatpush1.msra.mxu0 0.0
    %202 = vmatprep.subr.mxu0 0.0
    %203 = vmatpush1.msra.mxu0 0.0
    %204 = vmatprep.subr.mxu0 0.0
    %205 = vmatpush1.msra.mxu0 0.0
    %206 = vmatprep.subr.mxu0 0.0
    %207 = vmatpush1.msra.mxu0 0.0
    %208 = vmatprep.mubr.f32.mxu0 0.0
    %209 = vmatmul.mubr.f32.gmra.mrb[0].mxu0 %v142
    %v210 = vpop.f32.mrb[0].mxu0
    %v211 = vadd.f32 %v139, %v210
    %v212 = vpop.f32.mrb[0].mxu0
    %213 = vdwg.mxu0
    %v214 = vmax.f32 %v211, 0.0
    %v215 = vlaneseq
    %v216 = vshrl.u32 %v215, 7
    %v217 = vsub.s32 2, %v216
    %v218 = vrot.slane %v52, %v217
    %v219 = vrot.slane %v35, 4
    %vm220 = vcmask 31744
    %v222 = vsel %vm220, %v31, 0
    %v225 = vsel %vm220, %v32, 0
    %v227 = vsel %vm61, %v219, 0
    %229 = vmatprep.subr.mxu0 0.0
    %230 = vmatpush1.msra.mxu0 %v227
    %231 = vmatprep.subr.mxu0 0.0
    %232 = vmatpush1.msra.mxu0 0.0
    %233 = vmatprep.subr.mxu0 0.0
    %234 = vmatpush1.msra.mxu0 0.0
    %235 = vmatprep.subr.mxu0 0.0
    %236 = vmatpush1.msra.mxu0 0.0
    %237 = vmatprep.subr.mxu0 0.0
    %238 = vmatpush1.msra.mxu0 0.0
    %239 = vmatprep.subr.mxu0 0.0
    %240 = vmatpush1.msra.mxu0 0.0
    %241 = vmatprep.subr.mxu0 0.0
    %242 = vmatpush1.msra.mxu0 0.0
    %243 = vmatprep.subr.mxu0 0.0
    %244 = vmatpush1.msra.mxu0 0.0
    %245 = vmatprep.subr.mxu0 0.0
    %246 = vmatpush1.msra.mxu0 0.0
    %247 = vmatprep.subr.mxu0 0.0
    %248 = vmatpush1.msra.mxu0 0.0
    %249 = vmatprep.subr.mxu0 0.0
    %250 = vmatpush1.msra.mxu0 0.0
    %251 = vmatprep.subr.mxu0 0.0
    %252 = vmatpush1.msra.mxu0 0.0
    %253 = vmatprep.subr.mxu0 0.0
    %254 = vmatpush1.msra.mxu0 0.0
    %255 = vmatprep.subr.mxu0 0.0
    %256 = vmatpush1.msra.mxu0 0.0
    %257 = vmatprep.subr.mxu0 0.0
    %258 = vmatpush1.msra.mxu0 0.0
    %259 = vmatprep.subr.mxu0 0.0
    %260 = vmatpush1.msra.mxu0 0.0
    %261 = vmatprep.subr.mxu0 0.0
    %262 = vmatpush1.msra.mxu0 0.0
    %263 = vmatprep.subr.mxu0 0.0
    %264 = vmatpush1.msra.mxu0 0.0
    %265 = vmatprep.subr.mxu0 0.0
    %266 = vmatpush1.msra.mxu0 0.0
    %267 = vmatprep.subr.mxu0 0.0
    %268 = vmatpush1.msra.mxu0 0.0
    %269 = vmatprep.subr.mxu0 0.0
    %270 = vmatpush1.msra.mxu0 0.0
    %271 = vmatprep.subr.mxu0 0.0
    %272 = vmatpush1.msra.mxu0 0.0
    %273 = vmatprep.subr.mxu0 0.0
    %274 = vmatpush1.msra.mxu0 0.0
    %275 = vmatprep.subr.mxu0 0.0
    %276 = vmatpush1.msra.mxu0 0.0
    %277 = vmatprep.subr.mxu0 0.0
    %278 = vmatpush1.msra.mxu0 0.0
    %279 = vmatprep.subr.mxu0 0.0
    %280 = vmatpush1.msra.mxu0 0.0
    %281 = vmatprep.subr.mxu0 0.0
    %282 = vmatpush1.msra.mxu0 0.0
    %283 = vmatprep.subr.mxu0 0.0
    %284 = vmatpush1.msra.mxu0 0.0
    %285 = vmatprep.subr.mxu0 0.0
    %286 = vmatpush1.msra.mxu0 0.0
    %287 = vmatprep.subr.mxu0 0.0
    %288 = vmatpush1.msra.mxu0 0.0
    %289 = vmatprep.subr.mxu0 0.0
    %290 = vmatpush1.msra.mxu0 0.0
    %291 = vmatprep.subr.mxu0 0.0
    %292 = vmatpush1.msra.mxu0 0.0
    %293 = vmatprep.mubr.f32.mxu0 0.0
    %294 = vmatmul.mubr.f32.gmra.mrb[0].mxu0 %v222
    %v295 = vpop.f32.mrb[0].mxu0
    %v296 = vadd.f32 %v218, %v295
    %v297 = vpop.f32.mrb[0].mxu0
    %298 = vmatprep.mubr.f32.mxu0 0.0
    %299 = vmatmul.mubr.f32.gmra.mrb[0].mxu0 %v225
    %v300 = vpop.f32.mrb[0].mxu0
    %v301 = vadd.f32 %v218, %v300
    %v302 = vpop.f32.mrb[0].mxu0
    %303 = vdwg.mxu0
    %v304 = vmax.f32 %v296, 0.0
    %v305 = vmax.f32 %v301, 0.0
    %v306 = vlaneseq
    %v307 = vshrl.u32 %v306, 7
    %v308 = vsub.s32 3, %v307
    %v309 = vrot.slane %v52, %v308
    %v311 = vsel %vm140, %v304, 0
    %v314 = vsel %vm140, %v305, 0
    %316 = vmatprep.subr.mxu0 0.0
    %317 = vmatpush1.msra.mxu0 %v40
    %318 = vmatprep.subr.mxu0 0.0
    %319 = vmatpush1.msra.mxu0 %v41
    %320 = vmatprep.subr.mxu0 0.0
    %321 = vmatpush1.msra.mxu0 %v42
    %322 = vmatprep.subr.mxu0 0.0
    %323 = vmatpush1.msra.mxu0 %v43
    %324 = vmatprep.subr.mxu0 0.0
    %325 = vmatpush1.msra.mxu0 0.0
    %326 = vmatprep.subr.mxu0 0.0
    %327 = vmatpush1.msra.mxu0 0.0
    %328 = vmatprep.subr.mxu0 0.0
    %329 = vmatpush1.msra.mxu0 0.0
    %330 = vmatprep.subr.mxu0 0.0
    %331 = vmatpush1.msra.mxu0 0.0
    %332 = vmatprep.subr.mxu0 0.0
    %333 = vmatpush1.msra.mxu0 0.0
    %334 = vmatprep.subr.mxu0 0.0
    %335 = vmatpush1.msra.mxu0 0.0
    %336 = vmatprep.subr.mxu0 0.0
    %337 = vmatpush1.msra.mxu0 0.0
    %338 = vmatprep.subr.mxu0 0.0
    %339 = vmatpush1.msra.mxu0 0.0
    %340 = vmatprep.subr.mxu0 0.0
    %341 = vmatpush1.msra.mxu0 0.0
    %342 = vmatprep.subr.mxu0 0.0
    %343 = vmatpush1.msra.mxu0 0.0
    %344 = vmatprep.subr.mxu0 0.0
    %345 = vmatpush1.msra.mxu0 0.0
    %346 = vmatprep.subr.mxu0 0.0
    %347 = vmatpush1.msra.mxu0 0.0
    %348 = vmatprep.subr.mxu0 0.0
    %349 = vmatpush1.msra.mxu0 0.0
    %350 = vmatprep.subr.mxu0 0.0
    %351 = vmatpush1.msra.mxu0 0.0
    %352 = vmatprep.subr.mxu0 0.0
    %353 = vmatpush1.msra.mxu0 0.0
    %354 = vmatprep.subr.mxu0 0.0
    %355 = vmatpush1.msra.mxu0 0.0
    %356 = vmatprep.subr.mxu0 0.0
    %357 = vmatpush1.msra.mxu0 0.0
    %358 = vmatprep.subr.mxu0 0.0
    %359 = vmatpush1.msra.mxu0 0.0
    %360 = vmatprep.subr.mxu0 0.0
    %361 = vmatpush1.msra.mxu0 0.0
    %362 = vmatprep.subr.mxu0 0.0
    %363 = vmatpush1.msra.mxu0 0.0
    %364 = vmatprep.subr.mxu0 0.0
    %365 = vmatpush1.msra.mxu0 0.0
    %366 = vmatprep.subr.mxu0 0.0
    %367 = vmatpush1.msra.mxu0 0.0
    %368 = vmatprep.subr.mxu0 0.0
    %369 = vmatpush1.msra.mxu0 0.0
    %370 = vmatprep.subr.mxu0 0.0
    %371 = vmatpush1.msra.mxu0 0.0
    %372 = vmatprep.subr.mxu0 0.0
    %373 = vmatpush1.msra.mxu0 0.0
    %374 = vmatprep.subr.mxu0 0.0
    %375 = vmatpush1.msra.mxu0 0.0
    %376 = vmatprep.subr.mxu0 0.0
    %377 = vmatpush1.msra.mxu0 0.0
    %378 = vmatprep.subr.mxu0 0.0
    %379 = vmatpush1.msra.mxu0 0.0
    %380 = vmatprep.mubr.f32.mxu0 0.0
    %381 = vmatmul.mubr.f32.gmra.mrb[0].mxu0 %v311
    %v382 = vpop.f32.mrb[0].mxu0
    %v383 = vadd.f32 %v309, %v382
    %v384 = vpop.f32.mrb[0].mxu0
    %385 = vmatprep.mubr.f32.mxu0 0.0
    %386 = vmatmul.mubr.f32.gmra.mrb[0].mxu0 %v314
    %v387 = vpop.f32.mrb[0].mxu0
    %v388 = vadd.f32 %v309, %v387
    %v389 = vpop.f32.mrb[0].mxu0
    %390 = vdwg.mxu0
    %v391 = vmax.f32 %v383, 0.0
    %v392 = vmax.f32 %v388, 0.0
    %v393 = vlaneseq
    %v394 = vshrl.u32 %v393, 7
    %v395 = vsub.s32 4, %v394
    %v396 = vrot.slane %v52, %v395
    %v398 = vsel %vm140, %v214, 0
    %400 = vmatprep.subr.mxu0 0.0
    %401 = vmatpush1.msra.mxu0 %v44
    %402 = vmatprep.subr.mxu0 0.0
    %403 = vmatpush1.msra.mxu0 %v45
    %404 = vmatprep.subr.mxu0 0.0
    %405 = vmatpush1.msra.mxu0 %v46
    %406 = vmatprep.subr.mxu0 0.0
    %407 = vmatpush1.msra.mxu0 %v47
    %408 = vmatprep.subr.mxu0 0.0
    %409 = vmatpush1.msra.mxu0 0.0
    %410 = vmatprep.subr.mxu0 0.0
    %411 = vmatpush1.msra.mxu0 0.0
    %412 = vmatprep.subr.mxu0 0.0
    %413 = vmatpush1.msra.mxu0 0.0
    %414 = vmatprep.subr.mxu0 0.0
    %415 = vmatpush1.msra.mxu0 0.0
    %416 = vmatprep.subr.mxu0 0.0
    %417 = vmatpush1.msra.mxu0 0.0
    %418 = vmatprep.subr.mxu0 0.0
    %419 = vmatpush1.msra.mxu0 0.0
    %420 = vmatprep.subr.mxu0 0.0
    %421 = vmatpush1.msra.mxu0 0.0
    %422 = vmatprep.subr.mxu0 0.0
    %423 = vmatpush1.msra.mxu0 0.0
    %424 = vmatprep.subr.mxu0 0.0
    %425 = vmatpush1.msra.mxu0 0.0
    %426 = vmatprep.subr.mxu0 0.0
    %427 = vmatpush1.msra.mxu0 0.0
    %428 = vmatprep.subr.mxu0 0.0
    %429 = vmatpush1.msra.mxu0 0.0
    %430 = vmatprep.subr.mxu0 0.0
    %431 = vmatpush1.msra.mxu0 0.0
    %432 = vmatprep.subr.mxu0 0.0
    %433 = vmatpush1.msra.mxu0 0.0
    %434 = vmatprep.subr.mxu0 0.0
    %435 = vmatpush1.msra.mxu0 0.0
    %436 = vmatprep.subr.mxu0 0.0
    %437 = vmatpush1.msra.mxu0 0.0
    %438 = vmatprep.subr.mxu0 0.0
    %439 = vmatpush1.msra.mxu0 0.0
    %440 = vmatprep.subr.mxu0 0.0
    %441 = vmatpush1.msra.mxu0 0.0
    %442 = vmatprep.subr.mxu0 0.0
    %443 = vmatpush1.msra.mxu0 0.0
    %444 = vmatprep.subr.mxu0 0.0
    %445 = vmatpush1.msra.mxu0 0.0
    %446 = vmatprep.subr.mxu0 0.0
    %447 = vmatpush1.msra.mxu0 0.0
    %448 = vmatprep.subr.mxu0 0.0
    %449 = vmatpush1.msra.mxu0 0.0
    %450 = vmatprep.subr.mxu0 0.0
    %451 = vmatpush1.msra.mxu0 0.0
    %452 = vmatprep.subr.mxu0 0.0
    %453 = vmatpush1.msra.mxu0 0.0
    %454 = vmatprep.subr.mxu0 0.0
    %455 = vmatpush1.msra.mxu0 0.0
    %456 = vmatprep.subr.mxu0 0.0
    %457 = vmatpush1.msra.mxu0 0.0
    %458 = vmatprep.subr.mxu0 0.0
    %459 = vmatpush1.msra.mxu0 0.0
    %460 = vmatprep.subr.mxu0 0.0
    %461 = vmatpush1.msra.mxu0 0.0
    %462 = vmatprep.subr.mxu0 0.0
    %463 = vmatpush1.msra.mxu0 0.0
    %464 = vmatprep.mubr.f32.mxu0 0.0
    %465 = vmatmul.mubr.f32.gmra.mrb[0].mxu0 %v398
    %v466 = vpop.f32.mrb[0].mxu0
    %v467 = vadd.f32 %v396, %v466
    %v468 = vpop.f32.mrb[0].mxu0
    %469 = vdwg.mxu0
    %v471 = vsel %vm140, %v391, 0
    %v474 = vsel %vm140, %v392, 0
    %476 = vmatprep.subr.mxu0 0.0
    %477 = vmatpush1.msra.mxu0 %v44
    %478 = vmatprep.subr.mxu0 0.0
    %479 = vmatpush1.msra.mxu0 %v45
    %480 = vmatprep.subr.mxu0 0.0
    %481 = vmatpush1.msra.mxu0 %v46
    %482 = vmatprep.subr.mxu0 0.0
    %483 = vmatpush1.msra.mxu0 %v47
    %484 = vmatprep.subr.mxu0 0.0
    %485 = vmatpush1.msra.mxu0 0.0
    %486 = vmatprep.subr.mxu0 0.0
    %487 = vmatpush1.msra.mxu0 0.0
    %488 = vmatprep.subr.mxu0 0.0
    %489 = vmatpush1.msra.mxu0 0.0
    %490 = vmatprep.subr.mxu0 0.0
    %491 = vmatpush1.msra.mxu0 0.0
    %492 = vmatprep.subr.mxu0 0.0
    %493 = vmatpush1.msra.mxu0 0.0
    %494 = vmatprep.subr.mxu0 0.0
    %495 = vmatpush1.msra.mxu0 0.0
    %496 = vmatprep.subr.mxu0 0.0
    %497 = vmatpush1.msra.mxu0 0.0
    %498 = vmatprep.subr.mxu0 0.0
    %499 = vmatpush1.msra.mxu0 0.0
    %500 = vmatprep.subr.mxu0 0.0
    %501 = vmatpush1.msra.mxu0 0.0
    %502 = vmatprep.subr.mxu0 0.0
    %503 = vmatpush1.msra.mxu0 0.0
    %504 = vmatprep.subr.mxu0 0.0
    %505 = vmatpush1.msra.mxu0 0.0
    %506 = vmatprep.subr.mxu0 0.0
    %507 = vmatpush1.msra.mxu0 0.0
    %508 = vmatprep.subr.mxu0 0.0
    %509 = vmatpush1.msra.mxu0 0.0
    %510 = vmatprep.subr.mxu0 0.0
    %511 = vmatpush1.msra.mxu0 0.0
    %512 = vmatprep.subr.mxu0 0.0
    %513 = vmatpush1.msra.mxu0 0.0
    %514 = vmatprep.subr.mxu0 0.0
    %515 = vmatpush1.msra.mxu0 0.0
    %516 = vmatprep.subr.mxu0 0.0
    %517 = vmatpush1.msra.mxu0 0.0
    %518 = vmatprep.subr.mxu0 0.0
    %519 = vmatpush1.msra.mxu0 0.0
    %520 = vmatprep.subr.mxu0 0.0
    %521 = vmatpush1.msra.mxu0 0.0
    %522 = vmatprep.subr.mxu0 0.0
    %523 = vmatpush1.msra.mxu0 0.0
    %524 = vmatprep.subr.mxu0 0.0
    %525 = vmatpush1.msra.mxu0 0.0
    %526 = vmatprep.subr.mxu0 0.0
    %527 = vmatpush1.msra.mxu0 0.0
    %528 = vmatprep.subr.mxu0 0.0
    %529 = vmatpush1.msra.mxu0 0.0
    %530 = vmatprep.subr.mxu0 0.0
    %531 = vmatpush1.msra.mxu0 0.0
    %532 = vmatprep.subr.mxu0 0.0
    %533 = vmatpush1.msra.mxu0 0.0
    %534 = vmatprep.subr.mxu0 0.0
    %535 = vmatpush1.msra.mxu0 0.0
    %536 = vmatprep.subr.mxu0 0.0
    %537 = vmatpush1.msra.mxu0 0.0
    %538 = vmatprep.subr.mxu0 0.0
    %539 = vmatpush1.msra.mxu0 0.0
    %540 = vmatprep.mubr.f32.mxu0 0.0
    %541 = vmatmul.mubr.f32.gmra.mrb[0].mxu0 %v471
    %v542 = vpop.f32.mrb[0].mxu0
    %v543 = vadd.f32 %v396, %v542
    %v544 = vpop.f32.mrb[0].mxu0
    %545 = vmatprep.mubr.f32.mxu0 0.0
    %546 = vmatmul.mubr.f32.gmra.mrb[0].mxu0 %v474
    %v547 = vpop.f32.mrb[0].mxu0
    %v548 = vadd.f32 %v396, %v547
    %v549 = vpop.f32.mrb[0].mxu0
    %550 = vdwg.mxu0
    %552 = vrot.lane.b32.xlu0 %v467, 96
    %v553 = vpop.permute.xlu0 %552
    %v555 = vmul.f32 %v467, %v553
    %vm556 = vcmask 254976
    %v557 = vsel %vm556, %v555, 0.0
    %558 = vadd.xlane.f32.xlu0 %v557
    %v559 = vpop.xlane.xlu0 %558
    %v560 = vmul.f32 %v559, 0.17677669
    %v562 = vunpack.c.l.s4 1966171168
    %v563 = vunpack.c.0.s8 %v562
    %v564 = vlaneseq
    %v565 = vshrl.u32 %v564, 7
    %v566 = vsub.s32 %v563, %v565
    %v567 = vrot.slane %v467, %v566
    %v568 = vcombine.high %v567, %v567
    %v570 = vunpack.c.l.s4 1966171168
    %v571 = vunpack.c.0.s8 %v570
    %v572 = vlaneseq
    %v573 = vshrl.u32 %v572, 7
    %v574 = vsub.s32 %v571, %v573
    %v575 = vrot.slane %v567, %v574
    %v577 = vunpack.c.l.s4 1966171168
    %v578 = vunpack.c.0.s8 %v577
    %v579 = vlaneseq
    %v580 = vshrl.u32 %v579, 7
    %v581 = vsub.s32 %v578, %v580
    %v582 = vrot.slane %v568, %v581
    %v583 = vlaneseq
    %v584 = vshrl.u32 %v583, 7
    %v585 = vsub.s32 0, %v584
    %v586 = vrot.slane %v575, %v585
    %v587 = vlaneseq
    %v588 = vshrl.u32 %v587, 7
    %v589 = vsub.s32 0, %v588
    %v590 = vrot.slane %v582, %v589
    %595 = vrot.lane.b32.xlu0 %v543, 96
    %v596 = vpop.permute.xlu0 %595
    %597 = vrot.lane.b32.xlu0 %v548, 96
    %v598 = vpop.permute.xlu0 %597
    %v601 = vmul.f32 %v586, %v596
    %v602 = vmul.f32 %v590, %v598
    %v603 = vsel %vm140, %v601, 0.0
    %604 = vadd.xlane.f32.xlu0 %v603
    %v605 = vpop.xlane.xlu0 %604
    %v606 = vsel %vm140, %v602, 0.0
    %607 = vadd.xlane.f32.xlu0 %v606
    %v608 = vpop.xlane.xlu0 %607
    %v609 = vmul.f32 %v605, 0.17677669
    %v610 = vmul.f32 %v608, 0.17677669
    %vm611 = vcmp.eq.f32.partialorder %v33, 0.0
    %v612 = vsel %vm611, -1e+09, %v560
    %v615 = vlaneseq
    %v616 = vand.u32 %v615, 127
    %v617 = vadd.s32 %v616, 4294967295
    %v618 = vlaneseq
    %v619 = vshrl.u32 %v618, 7
    %v620 = vsub.s32 %v617, %v619
    %v621 = vrot.slane %v609, %v620
    %v622 = vlaneseq
    %v623 = vshrl.u32 %v622, 7
    %v624 = vsub.s32 %v617, %v623
    %v625 = vrot.slane %v610, %v624
    %vm626 = vcmask 1041409
    %v627 = vsel %vm626, %v625, %v621
    %v629 = vsel %vm611, -1e+09, %v627
    %vm630 = vcmask 66568
    %v631 = vsel %vm630, %v629, -inf
    %632 = vmax.xlane.f32.xlu0 %v631
    %v633 = vpop.xlane.xlu0 %632
    %v634 = vmax.f32 %v612, %v633
    %v635 = vsub.f32 %v612, %v634
    %v636 = vmul.f32 %v635, 1.442695
    %v637 = vpow.pop %v636
    %639 = vset.pattern.permute.xlu0 0
    %640 = vperm.xlu0 %639, %v634
    %v641 = vpop.permute.xlu0 %640
    %v643 = vsub.f32 %v629, %v641
    %v644 = vmul.f32 %v643, 1.442695
    %v645 = vpow.pop %v644
    %647 = vrot.lane.b32.xlu0 %v645, 127
    %v648 = vpop.permute.xlu0 %647
    %vm650 = vcmask 58368
    %v651 = vsel %vm650, %v648, 0.0
    %652 = vadd.xlane.f32.xlu0 %v651
    %v653 = vpop.xlane.xlu0 %652
    %v654 = vadd.f32 %v637, %v653
    %v655 = vrcp.pop %v654
    %v656 = vmul.f32 %v637, %v655
    %658 = vset.pattern.permute.xlu0 0
    %659 = vperm.xlu0 %658, %v654
    %v660 = vpop.permute.xlu0 %659
    %v662 = vrcp.pop %v660
    %v663 = vmul.f32 %v645, %v662
    %665 = vset.pattern.permute.xlu0 0
    %666 = vperm.xlu0 %665, %v656
    %v667 = vpop.permute.xlu0 %666
    %v669 = vmul.f32 %v667, %v467
    %v670 = vlaneseq
    %v671 = vshrl.u32 %v670, 7
    %v672 = vsub.s32 0, %v671
    %v673 = vrot.slane %v663, %v672
    %s675 = sor.u32 256, 1
    %676 = vbcast.lane.b32.xlu0 %v673, %s675
    %v677 = vpop.permute.xlu0 %676
    %v678 = vlaneseq
    %v679 = vshrl.u32 %v678, 7
    %v680 = vsub.s32 1, %v679
    %v681 = vrot.slane %v663, %v680
    %s683 = sor.u32 256, 1
    %684 = vbcast.lane.b32.xlu0 %v681, %s683
    %v685 = vpop.permute.xlu0 %684
    %v686 = vmul.f32 %v677, %v543
    %v687 = vmul.f32 %v685, %v548
    %vm688 = vcmask 785920
    %v689 = vsel %vm688, %v686, 0.0
    %v690 = vrot.slane %v689, 4
    %v691 = vadd.f32 %v689, %v690
    %v692 = vrot.slane %v691, 2
    %v693 = vadd.f32 %v691, %v692
    %v694 = vrot.slane %v693, 1
    %v695 = vadd.f32 %v693, %v694
    %v696 = vsel %vm688, %v687, 0.0
    %v697 = vrot.slane %v696, 4
    %v698 = vadd.f32 %v696, %v697
    %v699 = vrot.slane %v698, 2
    %v700 = vadd.f32 %v698, %v699
    %v701 = vrot.slane %v700, 1
    %v702 = vadd.f32 %v700, %v701
    %v705 = vsel %vm626, %v702, %v695
    %v707 = vadd.f32 %v669, %v705
    %v708 = vlaneseq
    %v709 = vshrl.u32 %v708, 7
    %v710 = vsub.s32 5, %v709
    %v711 = vrot.slane %v52, %v710
    %713 = vrot.lane.b32.xlu0 %v707, 64
    %v714 = vpop.permute.xlu0 %713
    %v715 = vsel %vm140, %v714, 0
    %717 = vmatprep.subr.mxu0 0.0
    %718 = vmatpush1.msra.mxu0 %v48
    %719 = vmatprep.subr.mxu0 0.0
    %720 = vmatpush1.msra.mxu0 %v49
    %721 = vmatprep.subr.mxu0 0.0
    %722 = vmatpush1.msra.mxu0 %v50
    %723 = vmatprep.subr.mxu0 0.0
    %724 = vmatpush1.msra.mxu0 %v51
    %725 = vmatprep.subr.mxu0 0.0
    %726 = vmatpush1.msra.mxu0 0.0
    %727 = vmatprep.subr.mxu0 0.0
    %728 = vmatpush1.msra.mxu0 0.0
    %729 = vmatprep.subr.mxu0 0.0
    %730 = vmatpush1.msra.mxu0 0.0
    %731 = vmatprep.subr.mxu0 0.0
    %732 = vmatpush1.msra.mxu0 0.0
    %733 = vmatprep.subr.mxu0 0.0
    %734 = vmatpush1.msra.mxu0 0.0
    %735 = vmatprep.subr.mxu0 0.0
    %736 = vmatpush1.msra.mxu0 0.0
    %737 = vmatprep.subr.mxu0 0.0
    %738 = vmatpush1.msra.mxu0 0.0
    %739 = vmatprep.subr.mxu0 0.0
    %740 = vmatpush1.msra.mxu0 0.0
    %741 = vmatprep.subr.mxu0 0.0
    %742 = vmatpush1.msra.mxu0 0.0
    %743 = vmatprep.subr.mxu0 0.0
    %744 = vmatpush1.msra.mxu0 0.0
    %745 = vmatprep.subr.mxu0 0.0
    %746 = vmatpush1.msra.mxu0 0.0
    %747 = vmatprep.subr.mxu0 0.0
    %748 = vmatpush1.msra.mxu0 0.0
    %749 = vmatprep.subr.mxu0 0.0
    %750 = vmatpush1.msra.mxu0 0.0
    %751 = vmatprep.subr.mxu0 0.0
    %752 = vmatpush1.msra.mxu0 0.0
    %753 = vmatprep.subr.mxu0 0.0
    %754 = vmatpush1.msra.mxu0 0.0
    %755 = vmatprep.subr.mxu0 0.0
    %756 = vmatpush1.msra.mxu0 0.0
    %757 = vmatprep.subr.mxu0 0.0
    %758 = vmatpush1.msra.mxu0 0.0
    %759 = vmatprep.subr.mxu0 0.0
    %760 = vmatpush1.msra.mxu0 0.0
    %761 = vmatprep.subr.mxu0 0.0
    %762 = vmatpush1.msra.mxu0 0.0
    %763 = vmatprep.subr.mxu0 0.0
    %764 = vmatpush1.msra.mxu0 0.0
    %765 = vmatprep.subr.mxu0 0.0
    %766 = vmatpush1.msra.mxu0 0.0
    %767 = vmatprep.subr.mxu0 0.0
    %768 = vmatpush1.msra.mxu0 0.0
    %769 = vmatprep.subr.mxu0 0.0
    %770 = vmatpush1.msra.mxu0 0.0
    %771 = vmatprep.subr.mxu0 0.0
    %772 = vmatpush1.msra.mxu0 0.0
    %773 = vmatprep.subr.mxu0 0.0
    %774 = vmatpush1.msra.mxu0 0.0
    %775 = vmatprep.subr.mxu0 0.0
    %776 = vmatpush1.msra.mxu0 0.0
    %777 = vmatprep.subr.mxu0 0.0
    %778 = vmatpush1.msra.mxu0 0.0
    %779 = vmatprep.subr.mxu0 0.0
    %780 = vmatpush1.msra.mxu0 0.0
    %781 = vmatprep.mubr.f32.mxu0 0.0
    %782 = vmatmul.mubr.f32.gmra.mrb[0].mxu0 %v715
    %v783 = vpop.f32.mrb[0].mxu0
    %v784 = vadd.f32 %v711, %v783
    %v785 = vpop.f32.mrb[0].mxu0
    %786 = vdwg.mxu0
    %v787 = vmax.f32 %v784, -20.0
    %v788 = vmin.f32 %v787, 2.0
    %v789 = vsub.f32 0.0, %v788
    %v790 = vsub.f32 %v789, 0.9189385
    %792 = vrot.lane.b32.xlu0 %v790, 124
    %v793 = vpop.permute.xlu0 %792
    %vm795 = vcmask 25600
    %v796 = vsel %vm795, %v793, 0.0
    %797 = vadd.xlane.f32.xlu0 %v796
    %v798 = vpop.xlane.xlu0 %797
    %v799 = vsub.f32 0.6931472, %v784
    %v800 = vmul.f32 %v784, -2.0
    %v801 = vmax.f32 %v800, 0.0
    %v802 = vand.u32 2147483647, %v800
    %v803 = vsub.f32 0.0, %v802
    %v804 = vmul.f32 %v803, 1.442695
    %v805 = vpow.pop %v804
    %v806 = vadd.f32 %v805, 1.0
    %v807 = vlog2.pop %v806
    %v808 = vmul.f32 %v807, 0.6931472
    %v809 = vmul.f32 -0.5, %v805
    %v810 = vadd.f32 %v809, 1.0
    %v811 = vmul.f32 %v810, %v805
    %v812 = vand.u32 2147483647, %v805
    %vm813 = vcmp.lt.f32.partialorder %v812, 0.0004427343
    %v814 = vsel %vm813, %v811, %v808
    %v815 = vadd.f32 %v801, %v814
    %v816 = vsub.f32 %v799, %v815
    %v817 = vmul.f32 %v816, 2.0
    %v818 = vsel %vm795, %v817, 0.0
    %819 = vadd.xlane.f32.xlu0 %v818
    %v820 = vpop.xlane.xlu0 %819
    %v821 = vsub.f32 %v798, %v820
    %v822 = vtanh.pop %v784
    %v823 = vsel %vm220, %v822, %v821
    %vm824 = vcmask 33792
    %825 = vst.msk [vmem:[#allocation2] sm:$0x3] %vm824, %v823
    // Predicated region
    $region34: #{tpu_custom_call.1} parent=1 // pred_check
      _
    $region35: #{tpu_custom_call.1} parent=1 // pred_check_branch
      %827 = sbr.rel (0) target = $region37
    $region36: #{tpu_custom_call.1} parent=1 // pred_region
      %s829 = ssub.s32 32, 32
      %830 = vsyncadd [#allocation3], %s829
      %s832 = sshll.u32 [#allocation2], 4
      %s833 = int_to_ptr.vmem [resolvable:$true] %s832
      %835 = dma.vmem_to_hbm [thread:$0]  %s833, 32, %s8, [#allocation3]
    $region37: #{tpu_custom_call.1} parent=1 // pred_fallthru
      _
    // Predicated region
    $region38: #{tpu_custom_call.1} parent=1 // pred_check
      _
    $region39: #{tpu_custom_call.1} parent=1 // pred_check_branch
      %837 = sbr.rel (0) target = $region41
    $region40: #{tpu_custom_call.1} parent=1 // pred_region
      %838 = dma.done [#allocation3], 32
    $region41: #{tpu_custom_call.1} parent=1 // pred_fallthru
      _
    %839 = vsyncpa [#allocation3], 1

</llo_original>
